<compile_context>
chip_gen: v7x
topology: tpu7x:2x2x1
jax: 0.10.0
libtpu: 0.0.40
codegen_flags: <defaults>
</compile_context>

<pallas_src>
import jax
import jax.numpy as jnp
from jax import lax
from jax.experimental import pallas as pl
from jax.experimental.pallas import tpu as pltpu


# ---------------------------------------------------------------------------
# Kernels
# ---------------------------------------------------------------------------

def _fcn_whole_kernel(x_ref, w_ref, o_ref):
    # Tiny single-block path. x: (B, K), w: (N_OUT, K) (PyTorch layout, transpose fused
    # into the contraction -- fine here, the whole problem is ~1 vreg of work).
    acc = lax.dot_general(
        x_ref[...],
        w_ref[...],
        dimension_numbers=(((1,), (1,)), ((), ())),
        preferred_element_type=jnp.float32,
    )
    o_ref[...] = jnp.cos(acc).astype(o_ref.dtype)


def _fcn_wres_kernel(x_ref, wt_ref, o_ref):
    # Weight-resident path. x: (tm, K), wt: (K, N_OUT) (already transposed once in HBM).
    acc = jnp.dot(x_ref[...], wt_ref[...], preferred_element_type=jnp.float32)
    o_ref[...] = jnp.cos(acc).astype(o_ref.dtype)


def _fcn_ktiled_kernel(x_ref, wt_ref, o_ref, acc_ref):
    # General tiled path. x: (tm, tk), wt: (tk, tn), acc: (tm, tn) f32 scratch.
    k = pl.program_id(2)

    @pl.when(k == 0)
    def _():
        acc_ref[...] = jnp.zeros_like(acc_ref)

    acc_ref[...] += lax.dot_general(
        x_ref[...],
        wt_ref[...],
        dimension_numbers=(((1,), (0,)), ((), ())),
        preferred_element_type=jnp.float32,
    )

    @pl.when(k == pl.num_programs(2) - 1)
    def _():
        o_ref[...] = jnp.cos(acc_ref[...]).astype(o_ref.dtype)


# ---------------------------------------------------------------------------
# Wrapper
# ---------------------------------------------------------------------------

def _round_up(a, m):
    return ((a + m - 1) // m) * m


def _vmem_capacity_bytes():
    try:
        return int(pltpu.get_tpu_info().vmem_capacity_bytes)
    except Exception:
        return 128 << 20  # conservative default (v5e/v6e)


def fcn_forward(
    x,
    weight,
    *,
    tm=None,
    tn=None,
    tk=None,
    use_bf16=False,
    small_bytes_threshold=2 << 20,
    weight_resident_max_bytes=12 << 20,
):
    """Forward of FCN: cos(x @ weight.T).

    x:      (B, N_INPUT)  float32
    weight: (N_OUTPUT, N_INPUT) float32 (PyTorch nn.Linear layout)
    """
    B, n_in = x.shape
    n_out, n_in_w = weight.shape
    assert n_in == n_in_w
    out_dtype = jnp.float32

    # ---------------- Tiny path: single block, no grid machinery --------------------
    f32_bytes = 4 * (B * n_in + n_out * n_in + B * n_out)
    if f32_bytes <= small_bytes_threshold:
        return pl.pallas_call(
            _fcn_whole_kernel,
            out_shape=jax.ShapeDtypeStruct((B, n_out), out_dtype),
            in_specs=[
                pl.BlockSpec((B, n_in), lambda: (0, 0)),
                pl.BlockSpec((n_out, n_in), lambda: (0, 0)),
            ],
            out_specs=pl.BlockSpec((B, n_out), lambda: (0, 0)),
        )(x, weight)

    # ---------------- Generation-aware budgets & tile defaults ----------------------
    vmem_cap = _vmem_capacity_bytes()
    vmem_limit = int(vmem_cap * 3 // 4)      # 48 MiB on v7x (64), 96 MiB on v5e/v6e (128)
    big_vmem = vmem_cap >= (128 << 20)

    if tm is None:
        tm = 512 if big_vmem else 256
    if tn is None:
        tn = 512 if big_vmem else 256
    if tk is None:
        tk = 512

    # Clamp tiles to the (128-rounded) problem size to avoid pointless padding.
    tm = min(tm, _round_up(B, 128))
    tn = min(tn, _round_up(n_out, 128))
    tk = min(tk, _round_up(n_in, 128))

    # Optional bf16 MXU path (f32 accumulation, f32 cos).
    cdt = jnp.bfloat16 if use_bf16 else x.dtype
    isz = jnp.dtype(cdt).itemsize
    xc = x.astype(cdt)
    # One-time HBM-side transpose: weight stored (N_IN, N_OUT) so the RHS contracts on its
    # leading dim inside the kernel (no per-tile XLU transpose).
    wt = weight.astype(cdt).T

    # ---------------- Weight-resident path: grid only over batch --------------------
    w_bytes = n_in * n_out * isz
    if w_bytes <= min(weight_resident_max_bytes, vmem_limit // 4):
        # Conservative per-step footprint: double-buffered x tile + out tile + 2x weight.
        footprint = 2 * tm * n_in * isz + 2 * tm * n_out * 4 + 2 * w_bytes
        if footprint <= int(vmem_limit * 0.9):
            Bp = _round_up(B, tm)
            xp = xc if Bp == B else jnp.pad(xc, ((0, Bp - B), (0, 0)))
            out = pl.pallas_call(
                _fcn_wres_kernel,
                out_shape=jax.ShapeDtypeStruct((Bp, n_out), out_dtype),
                grid_spec=pltpu.PrefetchScalarGridSpec(
                    num_scalar_prefetch=0,
                    grid=(Bp // tm,),
                    in_specs=[
                        pl.BlockSpec((tm, n_in), lambda i: (i, 0)),
                        # Constant index_map -> weight DMA'd into VMEM exactly once.
                        pl.BlockSpec((n_in, n_out), lambda i: (0, 0)),
                    ],
                    out_specs=pl.BlockSpec((tm, n_out), lambda i: (i, 0)),
                ),
                compiler_params=pltpu.CompilerParams(
                    dimension_semantics=("parallel",),
                    vmem_limit_bytes=vmem_limit,
                ),
            )(xp, wt)
            return out[:B] if Bp != B else out

    # ---------------- General path: 3-D grid with K reduction axis ------------------
    Bp = _round_up(B, tm)
    Np = _round_up(n_out, tn)
    Kp = _round_up(n_in, tk)
    xp = xc if (Bp == B and Kp == n_in) else jnp.pad(xc, ((0, Bp - B), (0, Kp - n_in)))
    wtp = wt if (Kp == n_in and Np == n_out) else jnp.pad(wt, ((0, Kp - n_in), (0, Np - n_out)))

    # K is the innermost ("arbitrary") axis; both operands stream per step, accumulator
    # lives in VMEM scratch, cos + store happen only on the last K step.
    out = pl.pallas_call(
        _fcn_ktiled_kernel,
        out_shape=jax.ShapeDtypeStruct((Bp, Np), out_dtype),
        grid_spec=pltpu.PrefetchScalarGridSpec(
            num_scalar_prefetch=0,
            grid=(Bp // tm, Np // tn, Kp // tk),
            in_specs=[
                pl.BlockSpec((tm, tk), lambda i, j, k: (i, k)),
                pl.BlockSpec((tk, tn), lambda i, j, k: (k, j)),
            ],
            out_specs=pl.BlockSpec((tm, tn), lambda i, j, k: (i, j)),
            scratch_shapes=[pltpu.VMEM((tm, tn), jnp.float32)],
        ),
        compiler_params=pltpu.CompilerParams(
            dimension_semantics=("parallel", "parallel", "arbitrary"),
            vmem_limit_bytes=vmem_limit,
        ),
    )(xp, wtp)
    return out[:B, :n_out]


# ---------------------------------------------------------------------------
# Self-test
# ---------------------------------------------------------------------------

if __name__ == "__main__":
    key = jax.random.PRNGKey(0)
    kx, kw, kx2, kw2 = jax.random.split(key, 4)

    # --- 1) Tiny path (the module's actual scale): FCN(16 -> 32), batch 8 -----------
    B, N_IN, N_OUT = 8, 16, 32
    x = jax.random.normal(kx, (B, N_IN), dtype=jnp.float32)
    bound = 1.0 / jnp.sqrt(jnp.float32(N_IN))
    w = jax.random.uniform(kw, (N_OUT, N_IN), dtype=jnp.float32, minval=-bound, maxval=bound)

    out = fcn_forward(x, w)
    jax.block_until_ready(out)
    ref = jnp.cos(x @ w.T)
    assert out.shape == (B, N_OUT)
    assert jnp.allclose(out, ref, atol=1e-5, rtol=1e-5)

    # --- 2) Tiled, weight-resident path (non-tile-aligned shapes -> padding) --------
    B2, K2, N2 = 300, 200, 260
    x2 = jax.random.normal(kx2, (B2, K2), dtype=jnp.float32)
    b2 = 1.0 / jnp.sqrt(jnp.float32(K2))
    w2 = jax.random.uniform(kw2, (N2, K2), dtype=jnp.float32, minval=-b2, maxval=b2)
    ref2 = jnp.cos(x2 @ w2.T)

    out2 = fcn_forward(x2, w2, tm=128, tn=128, tk=128, small_bytes_threshold=0)
    jax.block_until_ready(out2)
    assert out2.shape == (B2, N2)
    assert jnp.allclose(out2, ref2, atol=1e-4, rtol=1e-4)

    # --- 3) Tiled, K-accumulating path (weight residency disabled) ------------------
    out3 = fcn_forward(
        x2, w2, tm=128, tn=128, tk=128,
        small_bytes_threshold=0, weight_resident_max_bytes=0,
    )
    jax.block_until_ready(out3)
    assert jnp.allclose(out3, ref2, atol=1e-4, rtol=1e-4)

    # --- 4) bf16-operand MXU path (f32 accumulation; looser tolerance) --------------
    out4 = fcn_forward(x2, w2, tm=128, tn=128, tk=128,
                       small_bytes_threshold=0, use_bf16=True)
    jax.block_until_ready(out4)
    assert jnp.allclose(out4, ref2, atol=5e-2, rtol=5e-2)

    print("KERNEL_OK")
</pallas_src>

<mosaic_0001>
module attributes {stable_mosaic.version = 11 : i64} {
  func.func @_fcn_whole_kernel(%arg0: memref<8x16xf32, #tpu.memory_space<vmem>>, %arg1: memref<32x16xf32, #tpu.memory_space<vmem>>, %arg2: memref<8x32xf32, #tpu.memory_space<vmem>>) attributes {dimension_semantics = [], scalar_prefetch = 0 : i64, scratch_operands = 0 : i64, tpu.core_type = #tpu.core_type<tc>} {
    %c0 = arith.constant 0 : index
    %c0_0 = arith.constant 0 : index
    %0 = vector.load %arg0[%c0, %c0_0] : memref<8x16xf32, #tpu.memory_space<vmem>>, vector<8x16xf32>
    %c0_1 = arith.constant 0 : index
    %c0_2 = arith.constant 0 : index
    %1 = vector.load %arg1[%c0_1, %c0_2] : memref<32x16xf32, #tpu.memory_space<vmem>>, vector<32x16xf32>
    %cst = arith.constant dense<0.000000e+00> : vector<8x32xf32>
    %2 = tpu.matmul %0, %1, %cst {dimension_numbers = #tpu.dot_dimension_numbers<[1], [1], [0], [0], [0, 0, 1, 0], [], []>} : vector<8x16xf32>, vector<32x16xf32>, vector<8x32xf32> -> vector<8x32xf32>
    %3 = math.cos %2 : vector<8x32xf32>
    %c0_3 = arith.constant 0 : index
    %c0_4 = arith.constant 0 : index
    %4 = vector.load %arg2[%c0_3, %c0_4] : memref<8x32xf32, #tpu.memory_space<vmem>>, vector<8x32xf32>
    tpu.vector_store %arg2[%c0_3, %c0_4], %3 {strides = array<i32>} : memref<8x32xf32, #tpu.memory_space<vmem>>, vector<8x32xf32>,
    return
  }
}

</mosaic_0001>

<llo_original>
// kernel: tpu_custom_call.1
$region0: #{tpu_custom_call.1}
  #allocation0 [shape = 'u32[]', space=smem, size = 0x4, offset = 0x4, fixed_abs, tag = 'smem constant byte address 0x4 - core index']
  #allocation1 [shape = 'u32[144,128]{1,0:T(1,128)}', space=vmem, size = 0x12000, scoped, tag = 'internal scratch']
  %s0 = inlined_call_operand.vmem [shape: f32[8,16], index: 0, kind: input, shape index: {}]
  %s1 = inlined_call_operand.vmem [shape: f32[32,16], index: 1, kind: input, shape index: {}]
  %s2 = inlined_call_operand.hbm [shape: f32[8,32], index: 2, kind: output, shape index: {}]
  %s3 = sld [smem:[#allocation0]]
  $region18: #{tpu_custom_call.1} parent=0
    _
  %s5 = ssub.s32 1, %s3
  %s6 = scalar_select 0, %s5, %s3
  $region1: #{tpu_custom_call.1} parent=0
    #allocation2 [shape = 'u8[4096]{0}', space=vmem, size = 0x1000, scoped, tag = 'output window, operand 0, single buffered']
    #allocation3 [shape = 's32[1]{0}', space=sflag, size = 0x4, scoped, tag = 'scoped memory for tpu_custom_call.1']
    %7 = vsyncpa [#allocation3], 0
    // Predicated region
    $region2: #{tpu_custom_call.1} parent=1 // pred_check
      _
    $region3: #{tpu_custom_call.1} parent=1 // pred_check_branch
      %9 = sbr.rel (0) target = $region5
    $region4: #{tpu_custom_call.1} parent=1 // pred_region
      _
    $region5: #{tpu_custom_call.1} parent=1 // pred_fallthru
      _
    // Predicated region
    $region6: #{tpu_custom_call.1} parent=1 // pred_check
      _
    $region7: #{tpu_custom_call.1} parent=1 // pred_check_branch
      %11 = sbr.rel (0) target = $region9
    $region8: #{tpu_custom_call.1} parent=1 // pred_region
      _
    $region9: #{tpu_custom_call.1} parent=1 // pred_fallthru
      _
    %v12 = vld [vmem:[%s0] sm:$0xff]
    %v13 = vld [vmem:[%s1] sm:$0xff]
    %v14 = vld [vmem:[%s1 + $0x8] sm:$0xff]
    %v15 = vld [vmem:[%s1 + $0x10] sm:$0xff]
    %v16 = vld [vmem:[%s1 + $0x18] sm:$0xff]
    %vm17 = vcmask 130048
    %v19 = vsel %vm17, %v12, 0
    %v22 = vsel %vm17, %v13, 0
    %v25 = vsel %vm17, %v14, 0
    %v28 = vsel %vm17, %v15, 0
    %v31 = vsel %vm17, %v16, 0
    %33 = vmatprep.subr.mxu0 0.0
    %34 = vmatpush1.xpose.msra.mxu0 %v22
    %35 = vmatprep.subr.mxu0 0.0
    %36 = vmatpush1.xpose.msra.mxu0 %v25
    %37 = vmatprep.subr.mxu0 0.0
    %38 = vmatpush1.xpose.msra.mxu0 %v28
    %39 = vmatprep.subr.mxu0 0.0
    %40 = vmatpush1.xpose.msra.mxu0 %v31
    %41 = vmatprep.subr.mxu0 0.0
    %42 = vmatpush1.xpose.msra.mxu0 0.0
    %43 = vmatprep.subr.mxu0 0.0
    %44 = vmatpush1.xpose.msra.mxu0 0.0
    %45 = vmatprep.subr.mxu0 0.0
    %46 = vmatpush1.xpose.msra.mxu0 0.0
    %47 = vmatprep.subr.mxu0 0.0
    %48 = vmatpush1.xpose.msra.mxu0 0.0
    %49 = vmatprep.subr.mxu0 0.0
    %50 = vmatpush1.xpose.msra.mxu0 0.0
    %51 = vmatprep.subr.mxu0 0.0
    %52 = vmatpush1.xpose.msra.mxu0 0.0
    %53 = vmatprep.subr.mxu0 0.0
    %54 = vmatpush1.xpose.msra.mxu0 0.0
    %55 = vmatprep.subr.mxu0 0.0
    %56 = vmatpush1.xpose.msra.mxu0 0.0
    %57 = vmatprep.subr.mxu0 0.0
    %58 = vmatpush1.xpose.msra.mxu0 0.0
    %59 = vmatprep.subr.mxu0 0.0
    %60 = vmatpush1.xpose.msra.mxu0 0.0
    %61 = vmatprep.subr.mxu0 0.0
    %62 = vmatpush1.xpose.msra.mxu0 0.0
    %63 = vmatprep.subr.mxu0 0.0
    %64 = vmatpush1.xpose.msra.mxu0 0.0
    %65 = vmatprep.subr.mxu0 0.0
    %66 = vmatpush1.xpose.msra.mxu0 0.0
    %67 = vmatprep.subr.mxu0 0.0
    %68 = vmatpush1.xpose.msra.mxu0 0.0
    %69 = vmatprep.subr.mxu0 0.0
    %70 = vmatpush1.xpose.msra.mxu0 0.0
    %71 = vmatprep.subr.mxu0 0.0
    %72 = vmatpush1.xpose.msra.mxu0 0.0
    %73 = vmatprep.subr.mxu0 0.0
    %74 = vmatpush1.xpose.msra.mxu0 0.0
    %75 = vmatprep.subr.mxu0 0.0
    %76 = vmatpush1.xpose.msra.mxu0 0.0
    %77 = vmatprep.subr.mxu0 0.0
    %78 = vmatpush1.xpose.msra.mxu0 0.0
    %79 = vmatprep.subr.mxu0 0.0
    %80 = vmatpush1.xpose.msra.mxu0 0.0
    %81 = vmatprep.subr.mxu0 0.0
    %82 = vmatpush1.xpose.msra.mxu0 0.0
    %83 = vmatprep.subr.mxu0 0.0
    %84 = vmatpush1.xpose.msra.mxu0 0.0
    %85 = vmatprep.subr.mxu0 0.0
    %86 = vmatpush1.xpose.msra.mxu0 0.0
    %87 = vmatprep.subr.mxu0 0.0
    %88 = vmatpush1.xpose.msra.mxu0 0.0
    %89 = vmatprep.subr.mxu0 0.0
    %90 = vmatpush1.xpose.msra.mxu0 0.0
    %91 = vmatprep.subr.mxu0 0.0
    %92 = vmatpush1.xpose.msra.mxu0 0.0
    %93 = vmatprep.subr.mxu0 0.0
    %94 = vmatpush1.xpose.msra.mxu0 0.0
    %95 = vmatprep.subr.mxu0 0.0
    %96 = vmatpush1.xpose.msra.mxu0 0.0
    %97 = vmatprep.mubr.f32.mxu0 0.0
    %98 = vmatmul.mubr.f32.gmra.mrb[0].mxu0 %v19
    %v99 = vpop.f32.mrb[0].mxu0
    %v100 = vadd.f32 0.0, %v99
    %v101 = vpop.f32.mrb[0].mxu0
    %102 = vdwg.mxu0
    %v103 = vand.u32 2147483647, %v100
    %vm104 = vcmp.le.f32.partialorder %v103, 0.7853982
    %vm105 = vcmp.lt.s32.totalorder %v100, 0
    %v106 = vand.u32 %v100, 2139095040
    %v107 = vshrl.u32 %v106, 23
    %v108 = vsub.s32 %v107, 127
    %v109 = vand.u32 2147483647, %v100
    %v110 = vand.u32 %v109, 8388607
    %v111 = vor.u32 %v110, 8388608
    %v112 = vsub.s32 0, %v111
    %v113 = vadd.s32 %v108, 1
    %vm114 = vcmp.gt.s32.totalorder %v113, 0
    %v115 = vsel %vm114, %v113, 0
    %v116 = vshrl.u32 %v115, 5
    %v117 = vand.u32 %v115, 31
    %v118 = vsub.s32 32, %v117
    %v119 = vshrl.u32 683565275, %v118
    %v120 = vshll.u32 683565275, %v117
    %v121 = vshrl.u32 2475754826, %v118
    %v122 = vor.u32 %v120, %v121
    %v123 = vshll.u32 2475754826, %v117
    %v124 = vshrl.u32 2131351028, %v118
    %v125 = vor.u32 %v123, %v124
    %v126 = vshll.u32 2131351028, %v117
    %v127 = vshrl.u32 2102212464, %v118
    %v128 = vor.u32 %v126, %v127
    %v129 = vshll.u32 2102212464, %v117
    %v130 = vshrl.u32 920167782, %v118
    %v131 = vor.u32 %v129, %v130
    %v132 = vshll.u32 920167782, %v117
    %v133 = vshrl.u32 1326507024, %v118
    %v134 = vor.u32 %v132, %v133
    %vm135 = vcmp.lt.s32.totalorder %v116, 1
    %vm136 = vcmp.lt.s32.totalorder %v116, 2
    %vm137 = vcmp.lt.s32.totalorder %v116, 3
    %vm138 = vcmp.lt.s32.totalorder %v116, 4
    %v139 = vsel %vm135, %v119, %v122
    %v140 = vsel %vm138, %v128, 2102212464
    %v141 = vsel %vm137, %v125, %v140
    %v142 = vsel %vm136, %v139, %v141
    %v143 = vsel %vm135, %v122, %v125
    %v144 = vsel %vm138, %v131, 920167782
    %v145 = vsel %vm137, %v128, %v144
    %v146 = vsel %vm136, %v143, %v145
    %v147 = vsel %vm135, %v125, %v128
    %v148 = vsel %vm138, %v134, 1326507024
    %v149 = vsel %vm137, %v131, %v148
    %v150 = vsel %vm136, %v147, %v149
    %v151 = vshll.u32 %v111, 8
    %v152 = vmul.u32.u64.compose %v151, %v150
    %v153 = vextract.low.u32 %v152
    %v154 = vextract.high.u32 %v152
    %v155 = vmul.u32.u64.compose %v151, %v146
    %v156 = vextract.low.u32 %v155
    %v157 = vextract.high.u32 %v155
    %v158 = vmul.u32 %v151, %v142
    %v159 = vadd.s32 %v154, %v156
    %vm160 = vc.u32 %v154, %v156
    %v161 = vadd.s32 %v157, 1
    %v162 = vsel %vm160, %v161, %v157
    %v163 = vadd.s32 %v158, %v162
    %v164 = vadd.s32 %v163, 536870912
    %v165 = vshrl.u32 %v164, 30
    %v166 = vshll.u32 %v165, 30
    %v167 = vsub.s32 %v163, %v166
    %vm168 = vcmp.lt.s32.totalorder %v167, 0
    %v169 = vsub.s32 0, %v167
    %v170 = vsel %vm168, %v169, %v167
    %v171 = vclz %v170
    %v172 = vsub.s32 %v171, 2
    %vm173 = vcmp.gt.s32.totalorder 0, %v172
    %v174 = vsel %vm173, 0, %v172
    %v175 = vsub.s32 32, %v174
    %v176 = vshll.u32 %v167, %v174
    %v177 = vshrl.u32 %v159, %v175
    %v178 = vor.u32 %v176, %v177
    %v179 = vsub.s32 4294967266, %v174
    %v180 = vadd.s32 %v179, 127
    %v181 = vshll.u32 %v180, 23
    %v182 = vor.u32 4788187, %v181
    %v183 = vand.u32 2147483647, %v182
    %v185 = vcvt.s32.f32 %v178
    %v186 = vmul.f32 %v185, %v183
    %v187 = vxor.u32 %v186, 2147483648
    %v188 = vsel %vm105, %v187, %v186
    %v189 = vsub.s32 4, %v165
    %v190 = vsel %vm105, %v189, %v165
    %v191 = vsel %vm104, %v100, %v188
    %v192 = vsel %vm104, 0, %v190
    %v193 = vcosq.f32.pop %v191
    %v194 = vsinq.f32.pop %v191
    %vm195 = vweird.f32 %v100
    %v196 = vand.u32 %v192, 3
    %vm197 = vcmp.lt.s32.totalorder %v196, 2
    %vm198 = vcmp.eq.s32.totalorder %v196, 0
    %v199 = vxor.u32 %v194, 2147483648
    %v200 = vsel %vm198, %v193, %v199
    %vm201 = vcmp.eq.s32.totalorder %v196, 2
    %v202 = vxor.u32 %v193, 2147483648
    %v203 = vsel %vm201, %v202, %v194
    %v204 = vsel %vm197, %v200, %v203
    %v205 = vsel %vm195, nan, %v204
    %vm206 = vcmask 261120
    %207 = vst.msk [vmem:[#allocation2] sm:$0xff] %vm206, %v205
    // Predicated region
    $region10: #{tpu_custom_call.1} parent=1 // pred_check
      _
    $region11: #{tpu_custom_call.1} parent=1 // pred_check_branch
      %209 = sbr.rel (0) target = $region13
    $region12: #{tpu_custom_call.1} parent=1 // pred_region
      %s211 = ssub.s32 128, 128
      %212 = vsyncadd [#allocation3], %s211
      %s214 = sshll.u32 [#allocation2], 4
      %s215 = int_to_ptr.vmem [resolvable:$true] %s214
      %217 = dma.vmem_to_hbm [thread:$0]  %s215, 128, %s2, [#allocation3]
    $region13: #{tpu_custom_call.1} parent=1 // pred_fallthru
      _
    // Predicated region
    $region14: #{tpu_custom_call.1} parent=1 // pred_check
      _
    $region15: #{tpu_custom_call.1} parent=1 // pred_check_branch
      %219 = sbr.rel (0) target = $region17
    $region16: #{tpu_custom_call.1} parent=1 // pred_region
      %220 = dma.done [#allocation3], 128
    $region17: #{tpu_custom_call.1} parent=1 // pred_fallthru
      _
    %221 = vsyncpa [#allocation3], 1

</llo_original>
